<compile_context>
chip_gen: v5e
topology: v5e:2x2
jax: 0.10.0
libtpu: 0.0.40
codegen_flags: <defaults>
</compile_context>

<pallas_src>
from typing import List
import functools

import jax
import jax.numpy as jnp
from jax.experimental import pallas as pl
from jax.experimental.pallas import tpu as pltpu


# ----------------------------- Pallas kernel --------------------------------

def _affine_tanh_kernel(x_ref, u_ref, wx_ref, wu_ref, b_ref, o_ref):
    # out = tanh(x @ Wx + u @ Wu + b): two MXU pushes (f32 accumulate), a free
    # VPU bias add, and an EUP tanh in f32.
    acc = jnp.dot(x_ref[...], wx_ref[...], preferred_element_type=jnp.float32)
    acc = acc + jnp.dot(u_ref[...], wu_ref[...],
                        preferred_element_type=jnp.float32)
    acc = acc + b_ref[...].astype(jnp.float32)
    o_ref[...] = jnp.tanh(acc).astype(o_ref.dtype)


_GRIDLESS_MAX_BATCH = 1024   # below this, one gridless call (no pipelining)
_TARGET_BATCH_BLOCK = 1024   # ~128 KiB activation tile; amortizes step overhead
_NUM_TENSORCORES = 2         # v7x has 2 TCs; rounding is neutral on v5e/v6e


def _pick_batch_block(batch):
    """Pick a batch tile: >= ~1024 rows, grid length a multiple of the TC count
    (balanced "parallel" split on v7x), sublane-aligned (multiple of 8)."""
    nb = pl.cdiv(batch, _TARGET_BATCH_BLOCK)
    nb = ((nb + _NUM_TENSORCORES - 1) // _NUM_TENSORCORES) * _NUM_TENSORCORES
    block = pl.cdiv(batch, nb)
    return ((block + 7) // 8) * 8


@functools.partial(jax.jit, static_argnames=("batch_block",))
def affine_tanh(x, u, wx, wu, b, *, batch_block=None):
    """f(x, u) = tanh(x @ wx + u @ wu + b) as a single Pallas TPU kernel.

    - batch <= batch_block: gridless call; each operand is one full VMEM block.
    - batch  > batch_block: batch axis tiled with a "parallel" grid (ragged
      last block handled by Pallas masking); weights stay VMEM-resident.
    """
    B, NX = x.shape
    NU = u.shape[1]
    NH = wx.shape[1]
    assert wx.shape == (NX, NH) and wu.shape == (NU, NH) and b.shape == (1, NH)

    if batch_block is None:
        batch_block = B if B <= _GRIDLESS_MAX_BATCH else _pick_batch_block(B)

    if B <= batch_block:
        # Gridless: one kernel invocation, no grid bookkeeping or
        # double-buffering of tiny operands.
        vmem = pltpu.MemorySpace.VMEM
        return pl.pallas_call(
            _affine_tanh_kernel,
            out_shape=jax.ShapeDtypeStruct((B, NH), x.dtype),
            in_specs=[pl.BlockSpec(memory_space=vmem)] * 5,
            out_specs=pl.BlockSpec(memory_space=vmem),
        )(x, u, wx, wu, b)

    # Batch-tiled path: no padding / slicing around the call; Pallas masks the
    # ragged last block (out-of-bounds rows are simply never written).
    nb = pl.cdiv(B, batch_block)
    return pl.pallas_call(
        _affine_tanh_kernel,
        out_shape=jax.ShapeDtypeStruct((B, NH), x.dtype),
        grid_spec=pl.GridSpec(
            grid=(nb,),
            in_specs=[
                pl.BlockSpec((batch_block, NX), lambda i: (i, 0)),
                pl.BlockSpec((batch_block, NU), lambda i: (i, 0)),
                pl.BlockSpec((NX, NH), lambda i: (0, 0)),   # weight resident
                pl.BlockSpec((NU, NH), lambda i: (0, 0)),   # weight resident
                pl.BlockSpec((1, NH), lambda i: (0, 0)),    # bias resident
            ],
            out_specs=pl.BlockSpec((batch_block, NH), lambda i: (i, 0)),
        ),
        compiler_params=pltpu.CompilerParams(
            dimension_semantics=("parallel",)),   # v7x: shard over 2 TCs
    )(x, u, wx, wu, b)


# -------------------------- Component / Function -----------------------------

class Component:
    DEFAULT_INPUT_KEYS: List[str]
    DEFAULT_OUTPUT_KEYS: List[str]

    def __init__(self, input_key_map={}, name=None):
        self.name = name
        self.update_input_keys(input_key_map=input_key_map)
        self.output_keys = [
            f'{k}_{name}' if self.name is not None else k
            for k in self.DEFAULT_OUTPUT_KEYS
        ]

    def update_input_keys(self, input_key_map={}):
        assert isinstance(input_key_map, dict), (
            f'{type(self).__name__} input_key_map must be dict')
        self.input_key_map = {
            **{k: k for k in self.DEFAULT_INPUT_KEYS if k not in input_key_map},
            **input_key_map,
        }
        self.input_keys = list(self.input_key_map.values())
        assert len(self.input_keys) == len(self.DEFAULT_INPUT_KEYS), (
            'Length of given input keys must equal the length of default input keys')

    def _check_inputs(self, input_data):
        set_diff = set(self.input_keys) - set(input_data)
        assert len(set_diff) == 0, f' Missing inputs {set_diff}'

    def _remap_output(self, output_data):
        assert set(output_data.keys()) == set(self.DEFAULT_OUTPUT_KEYS), (
            f' Key mismatch Forward pass keys: {set(output_data.keys())}'
            f'   Default output keys: {set(self.DEFAULT_OUTPUT_KEYS)}')
        if self.name is not None:
            output_data = {f'{k}_{self.name}': output_data[k]
                           for k in self.DEFAULT_OUTPUT_KEYS}
        return output_data

    def __call__(self, data):
        self._check_inputs(data)
        out = self.forward(data)
        return self._remap_output(out)

    def __repr__(self):
        return f"{self.name}({', '.join(self.input_keys)}) -> {', '.join(self.output_keys)}"


class Function(Component):
    def __init__(self, func, input_keys, output_keys, name=None):
        self.DEFAULT_INPUT_KEYS = input_keys if input_keys is not None else []
        self.DEFAULT_OUTPUT_KEYS = (output_keys if isinstance(output_keys, list)
                                    else [output_keys])
        super().__init__(name=name)
        self.func = func

    def forward(self, data):
        x = [data[k] for k in self.input_keys]
        out = self.func(*x)
        out_d = {k: v for k, v in zip(
            self.DEFAULT_OUTPUT_KEYS,
            out if isinstance(out, tuple) else (out,))}
        return out_d


# ---------------------------------- main -------------------------------------

if __name__ == "__main__":
    key = jax.random.PRNGKey(0)
    kx, ku, kwx, kwu, kb = jax.random.split(key, 5)

    B, NX, NU, NH = 8, 32, 16, 32  # small shapes

    x = jax.random.normal(kx, (B, NX), dtype=jnp.float32)
    u = jax.random.normal(ku, (B, NU), dtype=jnp.float32)

    # Deterministic synthetic parameters (not a checkpoint load).
    wx = 0.1 * jax.random.normal(kwx, (NX, NH), dtype=jnp.float32)
    wu = 0.1 * jax.random.normal(kwu, (NU, NH), dtype=jnp.float32)
    b = 0.05 * jax.random.normal(kb, (1, NH), dtype=jnp.float32)

    def func(x_, u_):
        return affine_tanh(x_, u_, wx, wu, b)

    fn = Function(func, input_keys=["x", "u"], output_keys=["x_next"], name="dyn")

    out = fn({"x": x, "u": u})          # -> {"x_next_dyn": ...}
    y = out["x_next_dyn"]
    jax.block_until_ready(y)

    y_ref = jnp.tanh(x @ wx + u @ wu + b)
    assert y.shape == (B, NH)
    assert jnp.allclose(y, y_ref, atol=1e-5), "mismatch vs reference (gridless path)"

    # Batch-tiled path with a ragged last block (explicit small tile).
    B2 = 600
    kx2, ku2 = jax.random.split(jax.random.PRNGKey(1), 2)
    x2 = jax.random.normal(kx2, (B2, NX), dtype=jnp.float32)
    u2 = jax.random.normal(ku2, (B2, NU), dtype=jnp.float32)
    y2 = affine_tanh(x2, u2, wx, wu, b, batch_block=256)
    jax.block_until_ready(y2)
    y2_ref = jnp.tanh(x2 @ wx + u2 @ wu + b)
    assert y2.shape == (B2, NH)
    assert jnp.allclose(y2, y2_ref, atol=1e-5), "mismatch vs reference (tiled/ragged)"

    # Auto tile selection (grid length balanced across 2 TCs) + ragged last block.
    B3 = 2500
    kx3, ku3 = jax.random.split(jax.random.PRNGKey(2), 2)
    x3 = jax.random.normal(kx3, (B3, NX), dtype=jnp.float32)
    u3 = jax.random.normal(ku3, (B3, NU), dtype=jnp.float32)
    y3 = affine_tanh(x3, u3, wx, wu, b)
    jax.block_until_ready(y3)
    y3_ref = jnp.tanh(x3 @ wx + u3 @ wu + b)
    assert y3.shape == (B3, NH)
    assert jnp.allclose(y3, y3_ref, atol=1e-5), "mismatch vs reference (auto-tiled)"

    print("KERNEL_OK")
</pallas_src>

<mosaic_0001>
module attributes {stable_mosaic.version = 11 : i64} {
  func.func @_affine_tanh_kernel(%arg0: memref<8x32xf32, #tpu.memory_space<vmem>>, %arg1: memref<8x16xf32, #tpu.memory_space<vmem>>, %arg2: memref<32x32xf32, #tpu.memory_space<vmem>>, %arg3: memref<16x32xf32, #tpu.memory_space<vmem>>, %arg4: memref<1x32xf32, #tpu.memory_space<vmem>>, %arg5: memref<8x32xf32, #tpu.memory_space<vmem>>) attributes {dimension_semantics = [], scalar_prefetch = 0 : i64, scratch_operands = 0 : i64, tpu.core_type = #tpu.core_type<tc>} {
    %c0 = arith.constant 0 : index
    %c0_0 = arith.constant 0 : index
    %0 = vector.load %arg0[%c0, %c0_0] : memref<8x32xf32, #tpu.memory_space<vmem>>, vector<8x32xf32>
    %c0_1 = arith.constant 0 : index
    %c0_2 = arith.constant 0 : index
    %1 = vector.load %arg2[%c0_1, %c0_2] : memref<32x32xf32, #tpu.memory_space<vmem>>, vector<32x32xf32>
    %cst = arith.constant dense<0.000000e+00> : vector<8x32xf32>
    %2 = tpu.matmul %0, %1, %cst {dimension_numbers = #tpu.dot_dimension_numbers<[1], [0], [0], [1], [0, 0, 1, 1], [], []>} : vector<8x32xf32>, vector<32x32xf32>, vector<8x32xf32> -> vector<8x32xf32>
    %c0_3 = arith.constant 0 : index
    %c0_4 = arith.constant 0 : index
    %3 = vector.load %arg1[%c0_3, %c0_4] : memref<8x16xf32, #tpu.memory_space<vmem>>, vector<8x16xf32>
    %c0_5 = arith.constant 0 : index
    %c0_6 = arith.constant 0 : index
    %4 = vector.load %arg3[%c0_5, %c0_6] : memref<16x32xf32, #tpu.memory_space<vmem>>, vector<16x32xf32>
    %cst_7 = arith.constant dense<0.000000e+00> : vector<8x32xf32>
    %5 = tpu.matmul %3, %4, %cst_7 {dimension_numbers = #tpu.dot_dimension_numbers<[1], [0], [0], [1], [0, 0, 1, 1], [], []>} : vector<8x16xf32>, vector<16x32xf32>, vector<8x32xf32> -> vector<8x32xf32>
    %6 = arith.addf %2, %5 : vector<8x32xf32>
    %c0_8 = arith.constant 0 : index
    %c0_9 = arith.constant 0 : index
    %7 = vector.load %arg4[%c0_8, %c0_9] : memref<1x32xf32, #tpu.memory_space<vmem>>, vector<1x32xf32>
    %8 = vector.broadcast %7 : vector<1x32xf32> to vector<8x32xf32>
    %9 = arith.addf %6, %8 : vector<8x32xf32>
    %10 = math.tanh %9 : vector<8x32xf32>
    %c0_10 = arith.constant 0 : index
    %c0_11 = arith.constant 0 : index
    %11 = vector.load %arg5[%c0_10, %c0_11] : memref<8x32xf32, #tpu.memory_space<vmem>>, vector<8x32xf32>
    tpu.vector_store %arg5[%c0_10, %c0_11], %10 {strides = array<i32>} : memref<8x32xf32, #tpu.memory_space<vmem>>, vector<8x32xf32>,
    return
  }
}

</mosaic_0001>

<llo_original>
// kernel: affine_tanh.1
$region0: #{affine_tanh.1}
  #allocation0 [shape = 'u32[]', space=smem, size = 0x4, offset = 0x4, fixed_abs, tag = 'smem constant byte address 0x4 - core index']
  #allocation1 [shape = 'u32[72,128]{1,0:T(1,128)}', space=vmem, size = 0x9000, scoped, tag = 'internal scratch']
  %s0 = inlined_call_operand.hbm [shape: f32[8,32], index: 0, kind: input, shape index: {}]
  %s1 = inlined_call_operand.hbm [shape: f32[8,16], index: 1, kind: input, shape index: {}]
  %s2 = inlined_call_operand.hbm [shape: f32[32,32], index: 2, kind: input, shape index: {}]
  %s3 = inlined_call_operand.hbm [shape: f32[16,32], index: 3, kind: input, shape index: {}]
  %s4 = inlined_call_operand.vmem [shape: f32[1,32], index: 4, kind: input, shape index: {}]
  %s5 = inlined_call_operand.hbm [shape: f32[8,32], index: 5, kind: output, shape index: {}]
  %s6 = sld [smem:[#allocation0]]
  $region46: #{affine_tanh.1} parent=0
    _
  %s8 = ssub.s32 1, %s6
  %s9 = scalar_select 0, %s8, %s6
  $region1: #{affine_tanh.1} parent=0
    #allocation2 [shape = 'u8[4096]{0}', space=vmem, size = 0x1000, scoped, tag = 'input window, operand 0, single buffered']
    #allocation3 [shape = 's32[1]{0}', space=sflag, size = 0x4, scoped, tag = 'scoped memory for affine_tanh.1']
    #allocation4 [shape = 's32[1]{0}', space=sflag, size = 0x4, scoped, tag = 'scoped memory for affine_tanh.1']
    #allocation5 [shape = 'u8[4096]{0}', space=vmem, size = 0x1000, scoped, tag = 'input window, operand 1, single buffered']
    #allocation6 [shape = 's32[1]{0}', space=sflag, size = 0x4, scoped, tag = 'scoped memory for affine_tanh.1']
    #allocation7 [shape = 'u8[16384]{0}', space=vmem, size = 0x4000, scoped, tag = 'input window, operand 2, single buffered']
    #allocation8 [shape = 'u8[8192]{0}', space=vmem, size = 0x2000, scoped, tag = 'input window, operand 3, single buffered']
    #allocation9 [shape = 's32[1]{0}', space=sflag, size = 0x4, scoped, tag = 'scoped memory for affine_tanh.1']
    #allocation10 [shape = 'u8[4096]{0}', space=vmem, size = 0x1000, scoped, tag = 'output window, operand 0, single buffered']
    %10 = vsyncpa [#allocation3], 0
    %11 = vsyncpa [#allocation6], 0
    %12 = vsyncpa [#allocation9], 0
    %13 = vsyncpa [#allocation4], 0
    // Predicated region
    $region2: #{affine_tanh.1} parent=1 // pred_check
      _
    $region3: #{affine_tanh.1} parent=1 // pred_check_branch
      %15 = sbr.rel (0) target = $region5
    $region4: #{affine_tanh.1} parent=1 // pred_region
      %17 = vsyncadd [#allocation3], 0
      %s19 = sshll.u32 %s0, 4
      %s20 = int_to_ptr.hbm [resolvable:$true] %s19
      %s21 = sshll.u32 [#allocation2], 4
      %s22 = int_to_ptr.vmem [resolvable:$true] %s21
      %24 = dma.hbm_to_vmem [thread:$0]  %s20, 128, %s22, [#allocation3]
    $region5: #{affine_tanh.1} parent=1 // pred_fallthru
      _
    // Predicated region
    $region6: #{affine_tanh.1} parent=1 // pred_check
      _
    $region7: #{affine_tanh.1} parent=1 // pred_check_branch
      %26 = sbr.rel (0) target = $region9
    $region8: #{affine_tanh.1} parent=1 // pred_region
      %28 = vsyncadd [#allocation6], 0
      %s30 = sshll.u32 %s1, 4
      %s31 = int_to_ptr.hbm [resolvable:$true] %s30
      %s32 = sshll.u32 [#allocation5], 4
      %s33 = int_to_ptr.vmem [resolvable:$true] %s32
      %35 = dma.hbm_to_vmem [thread:$0]  %s31, 128, %s33, [#allocation6]
    $region9: #{affine_tanh.1} parent=1 // pred_fallthru
      _
    // Predicated region
    $region10: #{affine_tanh.1} parent=1 // pred_check
      _
    $region11: #{affine_tanh.1} parent=1 // pred_check_branch
      %37 = sbr.rel (0) target = $region13
    $region12: #{affine_tanh.1} parent=1 // pred_region
      %39 = vsyncadd [#allocation6], 0
      %s40 = sshll.u32 %s2, 4
      %s41 = int_to_ptr.hbm [resolvable:$true] %s40
      %s42 = sshll.u32 [#allocation7], 4
      %s43 = int_to_ptr.vmem [resolvable:$true] %s42
      %48 = dma.hbm_to_vmem [thread:$0]  %s41, 512, %s43, [#allocation6], 128, 128, 8
    $region13: #{affine_tanh.1} parent=1 // pred_fallthru
      _
    // Predicated region
    $region14: #{affine_tanh.1} parent=1 // pred_check
      _
    $region15: #{affine_tanh.1} parent=1 // pred_check_branch
      %50 = sbr.rel (0) target = $region17
    $region16: #{affine_tanh.1} parent=1 // pred_region
      %52 = vsyncadd [#allocation9], 0
      %s53 = sshll.u32 %s3, 4
      %s54 = int_to_ptr.hbm [resolvable:$true] %s53
      %s55 = sshll.u32 [#allocation8], 4
      %s56 = int_to_ptr.vmem [resolvable:$true] %s55
      %61 = dma.hbm_to_vmem [thread:$0]  %s54, 256, %s56, [#allocation9], 128, 128, 8
    $region17: #{affine_tanh.1} parent=1 // pred_fallthru
      _
    // Predicated region
    $region18: #{affine_tanh.1} parent=1 // pred_check
      _
    $region19: #{affine_tanh.1} parent=1 // pred_check_branch
      %63 = sbr.rel (0) target = $region21
    $region20: #{affine_tanh.1} parent=1 // pred_region
      _
    $region21: #{affine_tanh.1} parent=1 // pred_fallthru
      _
    // Predicated region
    $region22: #{affine_tanh.1} parent=1 // pred_check
      _
    $region23: #{affine_tanh.1} parent=1 // pred_check_branch
      %65 = sbr.rel (0) target = $region25
    $region24: #{affine_tanh.1} parent=1 // pred_region
      %67 = dma.done [#allocation3], 128
    $region25: #{affine_tanh.1} parent=1 // pred_fallthru
      _
    // Predicated region
    $region26: #{affine_tanh.1} parent=1 // pred_check
      _
    $region27: #{affine_tanh.1} parent=1 // pred_check_branch
      %69 = sbr.rel (0) target = $region29
    $region28: #{affine_tanh.1} parent=1 // pred_region
      %71 = dma.done [#allocation6], 128
    $region29: #{affine_tanh.1} parent=1 // pred_fallthru
      _
    // Predicated region
    $region30: #{affine_tanh.1} parent=1 // pred_check
      _
    $region31: #{affine_tanh.1} parent=1 // pred_check_branch
      %73 = sbr.rel (0) target = $region33
    $region32: #{affine_tanh.1} parent=1 // pred_region
      %75 = dma.done [#allocation6], 512
    $region33: #{affine_tanh.1} parent=1 // pred_fallthru
      _
    // Predicated region
    $region34: #{affine_tanh.1} parent=1 // pred_check
      _
    $region35: #{affine_tanh.1} parent=1 // pred_check_branch
      %77 = sbr.rel (0) target = $region37
    $region36: #{affine_tanh.1} parent=1 // pred_region
      %79 = dma.done [#allocation9], 256
    $region37: #{affine_tanh.1} parent=1 // pred_fallthru
      _
    %v80 = vld [vmem:[#allocation2] sm:$0xff]
    %v81 = vld [vmem:[#allocation7] sm:$0xff]
    %v82 = vld [vmem:[#allocation7 + $0x8] sm:$0xff]
    %v83 = vld [vmem:[#allocation7 + $0x10] sm:$0xff]
    %v84 = vld [vmem:[#allocation7 + $0x18] sm:$0xff]
    %v85 = vld [vmem:[#allocation5] sm:$0xff]
    %v86 = vld [vmem:[#allocation8] sm:$0xff]
    %v87 = vld [vmem:[#allocation8 + $0x8] sm:$0xff]
    %vm88 = vcmask 130048
    %v90 = vsel %vm88, %v85, 0
    %92 = vmatpush.msra.mxu0 0.0
    %93 = vmatpush.msra.mxu0 0.0
    %94 = vmatpush.msra.mxu0 0.0
    %95 = vmatpush.msra.mxu0 0.0
    %96 = vmatpush.msra.mxu0 0.0
    %97 = vmatpush.msra.mxu0 0.0
    %98 = vmatpush.msra.mxu0 0.0
    %99 = vmatpush.msra.mxu0 0.0
    %100 = vmatpush.msra.mxu0 0.0
    %101 = vmatpush.msra.mxu0 0.0
    %102 = vmatpush.msra.mxu0 0.0
    %103 = vmatpush.msra.mxu0 0.0
    %104 = vmatpush.msra.mxu0 0.0
    %105 = vmatpush.msra.mxu0 0.0
    %106 = vmatpush.msra.mxu0 %v87
    %107 = vmatpush.msra.mxu0 %v86
    %108 = vmatmul.f32.gmra.mxu0 %v90
    %v109 = vpop.f32.mrf.mxu0
    %v110 = vadd.f32 0.0, %v109
    %111 = vdwg.mxu0
    %vm112 = vcmask 261120
    %v114 = vsel %vm112, %v80, 0
    %116 = vmatpush.msra.mxu0 0.0
    %117 = vmatpush.msra.mxu0 0.0
    %118 = vmatpush.msra.mxu0 0.0
    %119 = vmatpush.msra.mxu0 0.0
    %120 = vmatpush.msra.mxu0 0.0
    %121 = vmatpush.msra.mxu0 0.0
    %122 = vmatpush.msra.mxu0 0.0
    %123 = vmatpush.msra.mxu0 0.0
    %124 = vmatpush.msra.mxu0 0.0
    %125 = vmatpush.msra.mxu0 0.0
    %126 = vmatpush.msra.mxu0 0.0
    %127 = vmatpush.msra.mxu0 0.0
    %128 = vmatpush.msra.mxu0 %v84
    %129 = vmatpush.msra.mxu0 %v83
    %130 = vmatpush.msra.mxu0 %v82
    %131 = vmatpush.msra.mxu0 %v81
    %132 = vmatmul.f32.gmra.mxu0 %v114
    %v133 = vpop.f32.mrf.mxu0
    %v134 = vadd.f32 %v110, %v133
    %135 = vdwg.mxu0
    %v136 = vld [vmem:[%s4] sm:$0x1]
    %v138 = vperm.slane %v136, 0
    %v140 = vadd.f32 %v134, %v138
    %v141 = vtanh.pop %v140
    %142 = vst.msk [vmem:[#allocation10] sm:$0xff] %vm112, %v141
    // Predicated region
    $region38: #{affine_tanh.1} parent=1 // pred_check
      _
    $region39: #{affine_tanh.1} parent=1 // pred_check_branch
      %144 = sbr.rel (0) target = $region41
    $region40: #{affine_tanh.1} parent=1 // pred_region
      %146 = vsyncadd [#allocation4], 0
      %s148 = sshll.u32 [#allocation10], 4
      %s149 = int_to_ptr.vmem [resolvable:$true] %s148
      %s150 = sshll.u32 %s5, 4
      %s151 = int_to_ptr.hbm [resolvable:$true] %s150
      %153 = dma.vmem_to_hbm [thread:$0]  %s149, 128, %s151, [#allocation4]
    $region41: #{affine_tanh.1} parent=1 // pred_fallthru
      _
    // Predicated region
    $region42: #{affine_tanh.1} parent=1 // pred_check
      _
    $region43: #{affine_tanh.1} parent=1 // pred_check_branch
      %155 = sbr.rel (0) target = $region45
    $region44: #{affine_tanh.1} parent=1 // pred_region
      %157 = dma.done [#allocation4], 128
    $region45: #{affine_tanh.1} parent=1 // pred_fallthru
      _
    %158 = vsyncpa [#allocation3], 1
    %159 = vsyncpa [#allocation6], 1
    %160 = vsyncpa [#allocation9], 1
    %161 = vsyncpa [#allocation4], 1

</llo_original>
